<compile_context>
chip_gen: v6e
topology: v6e:2x2x1
jax: 0.10.0
libtpu: 0.0.40
codegen_flags: <defaults>
</compile_context>

<pallas_src>
import jax
import jax.numpy as jnp
from jax import lax
from jax.experimental import pallas as pl
from jax.experimental.pallas import tpu as pltpu

EPS = 1e-5


def _default_vmem_limit_bytes():
    """~75% of physical VMEM (capped): 96 MiB on v5e/v6e (128 MiB), 48 MiB on v7x (64 MiB)."""
    try:
        cap = int(pltpu.get_tpu_info().vmem_capacity_bytes)
        return max(32 * 1024 * 1024, min(96 * 1024 * 1024, (cap * 3) // 4))
    except Exception:
        return 48 * 1024 * 1024


_VMEM_LIMIT_BYTES = _default_vmem_limit_bytes()


def _compiler_params():
    return pltpu.CompilerParams(
        dimension_semantics=("parallel",),
        vmem_limit_bytes=_VMEM_LIMIT_BYTES,
    )


def _row_tile(rows, target=512):
    """Largest multiple of 8 that divides `rows` and is <= target (else full rows).

    Note: the full-rows fallback can exceed the VMEM budget for pathological
    row counts; fine for typical N*H*W which are highly composite.
    """
    if rows <= target:
        return rows
    cand = target - (target % 8)
    while cand >= 8:
        if rows % cand == 0:
            return cand
        cand -= 8
    return rows


def _lane_width(total, chans, target=512):
    """Widest lane dim (chans * 2^k) dividing `total`, capped at `target`."""
    lw = chans
    while lw * 2 <= target and total % (lw * 2) == 0:
        lw *= 2
    return lw


# ----------------------------- in-kernel helpers ------------------------------
def _packed_stats(y_f32, count):
    """(1, 2, C) packed [sum; sum of squared deviations about the tile mean]."""
    s = jnp.sum(y_f32, axis=0, keepdims=True)                 # (1, C)
    mu = s / count
    d = y_f32 - mu
    ssd = jnp.sum(d * d, axis=0, keepdims=True)               # (1, C)
    return jnp.concatenate([s, ssd], axis=0)[None]            # (1, 2, C)


def _shift2d(x, dy, dx):
    """y[h, w] = x[h+dy, w+dx] with zero fill; register-level slice+concat only."""
    H, W, C = x.shape
    if dy > 0:
        x = jnp.concatenate([x[dy:], jnp.zeros((dy, W, C), x.dtype)], axis=0)
    elif dy < 0:
        x = jnp.concatenate([jnp.zeros((-dy, W, C), x.dtype), x[:dy]], axis=0)
    if dx > 0:
        x = jnp.concatenate([x[:, dx:], jnp.zeros((H, dx, C), x.dtype)], axis=1)
    elif dx < 0:
        x = jnp.concatenate([jnp.zeros((H, -dx, C), x.dtype), x[:, :dx]], axis=1)
    return x


# ----------------------------- stage kernels ----------------------------------
def _conv1_kernel(x_ref, w_ref, b_ref, y_ref, stats_ref):
    """1x1 conv: f32 x read, in-kernel bf16 cast for the MXU, f32 accumulate;
    packed per-tile BN1 stats from the f32 accumulator; bf16 store of y1."""
    x = x_ref[...].astype(jnp.bfloat16)
    y = jnp.dot(x, w_ref[...], preferred_element_type=jnp.float32) + b_ref[...]
    y_ref[...] = y.astype(y_ref.dtype)
    stats_ref[...] = _packed_stats(y, y.shape[0])


def _bn_relu_conv3x3_kernel(y1_ref, s_ref, t_ref, w_ref, b_ref, y2_ref, stats_ref):
    """bn1+relu (f32 VPU) -> 3x3 'SAME' conv as ONE im2col (H*W, 9C) x (9C, C)
    MXU matmul (bf16 operands, f32 accumulate); packed BN2 stats; bf16 store."""
    _, H, W, C = y1_ref.shape
    h1 = jnp.maximum(y1_ref[0].astype(jnp.float32) * s_ref[...] + t_ref[...], 0.0)
    h1 = h1.astype(jnp.bfloat16)                               # cast once, pre-taps
    taps = [_shift2d(h1, ky - 1, kx - 1).reshape(H * W, C)
            for ky in range(3) for kx in range(3)]
    patches = jnp.concatenate(taps, axis=-1)                   # (H*W, 9C) bf16
    y2 = jnp.dot(patches, w_ref[...], preferred_element_type=jnp.float32) + b_ref[...]
    y2_ref[0] = y2.reshape(H, W, C).astype(y2_ref.dtype)
    stats_ref[...] = _packed_stats(y2, H * W)


def _bn_relu_conv1x1_kernel(y_in_ref, s_ref, t_ref, w_ref, b_ref, y_ref, stats_ref):
    """bn2+relu (f32) -> 1x1 conv C->4C (bf16 MXU, f32 acc); packed BN3 stats."""
    h = jnp.maximum(y_in_ref[...].astype(jnp.float32) * s_ref[...] + t_ref[...], 0.0)
    y = jnp.dot(h.astype(jnp.bfloat16), w_ref[...],
                preferred_element_type=jnp.float32) + b_ref[...]
    y_ref[...] = y.astype(y_ref.dtype)
    stats_ref[...] = _packed_stats(y, y.shape[0])


def _bn_relu_residual_kernel(y3_ref, x_ref, s_ref, t_ref, o_ref):
    """bn3 + relu + residual add + relu on a lane-dense (rows, LANE) layout."""
    h3 = jnp.maximum(y3_ref[...].astype(jnp.float32) * s_ref[...] + t_ref[...], 0.0)
    o_ref[...] = jnp.maximum(h3 + x_ref[...], 0.0)


# ------------------------------ host wrapper -----------------------------------
def _bn_scale_shift(stats, tile_count, total_count, gamma, beta):
    """Combine centered per-tile (sum, ssd) stats -> BN scale/shift (tiny, f32).

    var_total = (sum_t ssd_t + n_t * sum_t (mean_t - mean)^2) / N  (parallel form,
    numerically stable; no E[y^2]-mean^2 cancellation)."""
    sums = stats[:, 0, :]                                      # (g, C)
    ssds = stats[:, 1, :]                                      # (g, C)
    mean = jnp.sum(sums, axis=0, keepdims=True) / total_count  # (1, C)
    tile_means = sums / tile_count                             # (g, C)
    between = jnp.sum((tile_means - mean) ** 2, axis=0, keepdims=True) * tile_count
    var = (jnp.sum(ssds, axis=0, keepdims=True) + between) / total_count
    var = jnp.maximum(var, 0.0)
    scale = gamma * lax.rsqrt(var + EPS)
    shift = beta - mean * scale
    return scale, shift


def bottleneck_block(x_nhwc, params, *, row_tile=512, out_lane_target=512):
    """BottleneckBlock forward (stride=1, i_downsample=None). x_nhwc: (N,H,W,Cin) f32."""
    N, H, W, Cin = x_nhwc.shape
    C = params["w1"].shape[1]
    C4 = params["w3"].shape[1]
    assert Cin == C4, "i_downsample=None requires in_channels == 4*out_channels"
    rows = N * H * W
    f32, bf16 = jnp.float32, jnp.bfloat16
    cp = _compiler_params()

    x_flat = x_nhwc.reshape(rows, Cin)               # stays f32; cast inside stage A
    w1 = params["w1"].astype(bf16)                   # (Cin, C)
    w2col = params["w2"].reshape(9 * C, C).astype(bf16)   # (9C, C) im2col weight
    w3 = params["w3"].astype(bf16)                   # (C, C4)

    tr = _row_tile(rows, row_tile)
    g = rows // tr
    const2 = lambda i: (0, 0)                        # full-array blocks, revisited

    # ---- stage A: conv1 (1x1) + BN1 stats --------------------------------------
    y1, st1 = pl.pallas_call(
        _conv1_kernel,
        grid=(g,),
        in_specs=[
            pl.BlockSpec((tr, Cin), lambda i: (i, 0)),
            pl.BlockSpec((Cin, C), const2),
            pl.BlockSpec((1, C), const2),
        ],
        out_specs=(
            pl.BlockSpec((tr, C), lambda i: (i, 0)),
            pl.BlockSpec((1, 2, C), lambda i: (i, 0, 0)),
        ),
        out_shape=(
            jax.ShapeDtypeStruct((rows, C), bf16),
            jax.ShapeDtypeStruct((g, 2, C), f32),
        ),
        compiler_params=cp,
    )(x_flat, w1, params["b1"])
    s1, t1 = _bn_scale_shift(st1, tr, rows, params["g1"], params["be1"])

    # ---- stage B: bn1+relu -> conv2 (3x3, pad 1, im2col) + BN2 stats -----------
    y2, st2 = pl.pallas_call(
        _bn_relu_conv3x3_kernel,
        grid=(N,),
        in_specs=[
            pl.BlockSpec((1, H, W, C), lambda n: (n, 0, 0, 0)),
            pl.BlockSpec((1, C), const2),
            pl.BlockSpec((1, C), const2),
            pl.BlockSpec((9 * C, C), const2),
            pl.BlockSpec((1, C), const2),
        ],
        out_specs=(
            pl.BlockSpec((1, H, W, C), lambda n: (n, 0, 0, 0)),
            pl.BlockSpec((1, 2, C), lambda n: (n, 0, 0)),
        ),
        out_shape=(
            jax.ShapeDtypeStruct((N, H, W, C), bf16),
            jax.ShapeDtypeStruct((N, 2, C), f32),
        ),
        compiler_params=cp,
    )(y1.reshape(N, H, W, C), s1, t1, w2col, params["b2"])
    s2, t2 = _bn_scale_shift(st2, H * W, rows, params["g2"], params["be2"])

    # ---- stage C: bn2+relu -> conv3 (1x1, C -> 4C) + BN3 stats ------------------
    y3, st3 = pl.pallas_call(
        _bn_relu_conv1x1_kernel,
        grid=(g,),
        in_specs=[
            pl.BlockSpec((tr, C), lambda i: (i, 0)),
            pl.BlockSpec((1, C), const2),
            pl.BlockSpec((1, C), const2),
            pl.BlockSpec((C, C4), const2),
            pl.BlockSpec((1, C4), const2),
        ],
        out_specs=(
            pl.BlockSpec((tr, C4), lambda i: (i, 0)),
            pl.BlockSpec((1, 2, C4), lambda i: (i, 0, 0)),
        ),
        out_shape=(
            jax.ShapeDtypeStruct((rows, C4), bf16),
            jax.ShapeDtypeStruct((g, 2, C4), f32),
        ),
        compiler_params=cp,
    )(y2.reshape(rows, C), s2, t2, w3, params["b3"])
    s3, t3 = _bn_scale_shift(st3, tr, rows, params["g3"], params["be3"])

    # ---- stage D: bn3+relu + residual + relu on a lane-dense layout -------------
    total = rows * C4
    lw = _lane_width(total, C4, out_lane_target)
    reps = lw // C4
    r2 = total // lw
    trd = _row_tile(r2, row_tile)
    gd = r2 // trd
    s3l = jnp.tile(s3, (1, reps))                # channel pattern repeats every C4 lanes
    t3l = jnp.tile(t3, (1, reps))
    out_flat = pl.pallas_call(
        _bn_relu_residual_kernel,
        grid=(gd,),
        in_specs=[
            pl.BlockSpec((trd, lw), lambda i: (i, 0)),
            pl.BlockSpec((trd, lw), lambda i: (i, 0)),
            pl.BlockSpec((1, lw), const2),
            pl.BlockSpec((1, lw), const2),
        ],
        out_specs=pl.BlockSpec((trd, lw), lambda i: (i, 0)),
        out_shape=jax.ShapeDtypeStruct((r2, lw), f32),
        compiler_params=cp,
    )(y3.reshape(r2, lw), x_flat.reshape(r2, lw), s3l, t3l)

    return out_flat.reshape(N, H, W, C4)


# ----------------------------- pure-JAX references ------------------------------
def _ref_block(x, p, *, quantize):
    """quantize=True mirrors the kernel's bf16 MXU operands AND bf16-stored
    intermediates (strict check); quantize=False is pure-f32 module semantics."""
    dn = ("NHWC", "HWIO", "NHWC")
    f32, bf16 = jnp.float32, jnp.bfloat16

    def conv(h, w, padding):
        if quantize:
            h, w, prec = h.astype(bf16), w.astype(bf16), None
        else:
            prec = lax.Precision.HIGHEST
        return lax.conv_general_dilated(
            h, w, (1, 1), padding, dimension_numbers=dn,
            preferred_element_type=f32, precision=prec)

    def bn_relu(y, g, b):
        # Stats from the f32 conv output (as in the kernel); BN applied to the
        # bf16-rounded stored value when mimicking the kernel.
        mean = jnp.mean(y, axis=(0, 1, 2), keepdims=True)
        var = jnp.mean((y - mean) ** 2, axis=(0, 1, 2), keepdims=True)
        scale = g * lax.rsqrt(var + EPS)
        shift = b - mean * scale
        yq = y.astype(bf16).astype(f32) if quantize else y
        return jnp.maximum(yq * scale + shift, 0.0)

    h = conv(x, p["w1"].reshape(1, 1, *p["w1"].shape), "VALID") + p["b1"]
    h = bn_relu(h, p["g1"], p["be1"])
    h = conv(h, p["w2"], "SAME") + p["b2"]
    h = bn_relu(h, p["g2"], p["be2"])
    h = conv(h, p["w3"].reshape(1, 1, *p["w3"].shape), "VALID") + p["b3"]
    h = bn_relu(h, p["g3"], p["be3"])
    return jnp.maximum(h + x, 0.0)


def _init_params(key, in_channels, out_channels):
    C, Cin = out_channels, in_channels
    Cout = out_channels * 4
    ks = jax.random.split(key, 9)
    f = jnp.float32
    return {
        # conv weights as (Cin, Cout) for 1x1 and (kh, kw, Cin, Cout) HWIO for 3x3
        "w1": 0.2 * jax.random.normal(ks[0], (Cin, C), f),
        "b1": 0.1 * jax.random.normal(ks[1], (1, C), f),
        "g1": jnp.ones((1, C), f) + 0.1 * jax.random.normal(ks[2], (1, C), f),
        "be1": 0.1 * jax.random.normal(ks[3], (1, C), f),
        "w2": 0.2 * jax.random.normal(ks[4], (3, 3, C, C), f),
        "b2": 0.1 * jax.random.normal(ks[5], (1, C), f),
        "g2": jnp.ones((1, C), f),
        "be2": jnp.zeros((1, C), f),
        "w3": 0.2 * jax.random.normal(ks[6], (C, Cout), f),
        "b3": 0.1 * jax.random.normal(ks[7], (1, Cout), f),
        "g3": jnp.ones((1, Cout), f) + 0.1 * jax.random.normal(ks[8], (1, Cout), f),
        "be3": jnp.zeros((1, Cout), f),
    }


if __name__ == "__main__":
    key = jax.random.PRNGKey(0)
    k_x, k_p = jax.random.split(key)

    N, H, W = 2, 16, 16
    out_channels = 4
    in_channels = out_channels * 4   # residual add (i_downsample=None) requires this

    # PyTorch-style NCHW input, permuted to NHWC for the kernel.
    x_nchw = jax.random.normal(k_x, (N, in_channels, H, W), jnp.float32)
    x_nhwc = jnp.transpose(x_nchw, (0, 2, 3, 1))
    params = _init_params(k_p, in_channels, out_channels)

    out_nhwc = jax.block_until_ready(bottleneck_block(x_nhwc, params))
    out_nchw = jnp.transpose(out_nhwc, (0, 3, 1, 2))   # back to PyTorch layout

    # Strict check: reference with the same bf16 operand + bf16 intermediate
    # quantization.  Isolated bf16-rounding-boundary flips between the two
    # pipelines can move single elements by ~1 bf16 ulp, so gate on a loose max
    # and a tight mean.
    ref_q = _ref_block(x_nhwc, params, quantize=True)
    dq = jnp.abs(out_nhwc - ref_q)
    max_q, mean_q = float(jnp.max(dq)), float(jnp.mean(dq))
    if max_q > 5e-2 or mean_q > 1e-3:
        raise AssertionError(
            f"mismatch vs quantized reference: max {max_q}, mean {mean_q}")

    # Sanity check: pure-f32 module semantics (bf16 operands + intermediates cost
    # a small, bounded error).
    ref_f = _ref_block(x_nhwc, params, quantize=False)
    df = jnp.abs(out_nhwc - ref_f)
    max_f, mean_f = float(jnp.max(df)), float(jnp.mean(df))
    if max_f > 6e-1 or mean_f > 1e-1:
        raise AssertionError(f"mismatch vs f32 reference: max {max_f}, mean {mean_f}")

    print("KERNEL_OK")
</pallas_src>

<mosaic_0001>
module attributes {stable_mosaic.version = 11 : i64} {
  func.func @_conv1_kernel(%arg0: i32, %arg1: memref<512x16xf32, #tpu.memory_space<vmem>>, %arg2: memref<16x4xbf16, #tpu.memory_space<vmem>>, %arg3: memref<1x4xf32, #tpu.memory_space<vmem>>, %arg4: memref<512x4xbf16, #tpu.memory_space<vmem>>, %arg5: memref<1x2x4xf32, #tpu.memory_space<vmem>>) attributes {dimension_semantics = [#tpu.dimension_semantics<parallel>], iteration_bounds = array<i64: 1>, scalar_prefetch = 0 : i64, scratch_operands = 0 : i64, tpu.core_type = #tpu.core_type<tc>, window_params = [{transform_indices = @transform_0, window_bounds = array<i64: 512, 16>}, {pipeline_mode = #tpu.pipeline_mode<synchronous>, transform_indices = @transform_1, window_bounds = array<i64: 16, 4>}, {pipeline_mode = #tpu.pipeline_mode<synchronous>, transform_indices = @transform_2, window_bounds = array<i64: 1, 4>}, {transform_indices = @transform_3, window_bounds = array<i64: 512, 4>}, {transform_indices = @transform_4, window_bounds = array<i64: 1, 2, 4>}]} {
    %c0 = arith.constant 0 : index
    %c0_0 = arith.constant 0 : index
    %0 = vector.load %arg1[%c0, %c0_0] : memref<512x16xf32, #tpu.memory_space<vmem>>, vector<512x16xf32>
    %1 = arith.truncf %0 : vector<512x16xf32> to vector<512x16xbf16>
    %c0_1 = arith.constant 0 : index
    %c0_2 = arith.constant 0 : index
    %2 = vector.load %arg2[%c0_1, %c0_2] : memref<16x4xbf16, #tpu.memory_space<vmem>>, vector<16x4xbf16>
    %cst = arith.constant dense<0.000000e+00> : vector<512x4xf32>
    %3 = tpu.matmul %1, %2, %cst {dimension_numbers = #tpu.dot_dimension_numbers<[1], [0], [0], [1], [0, 0, 1, 1], [], []>} : vector<512x16xbf16>, vector<16x4xbf16>, vector<512x4xf32> -> vector<512x4xf32>
    %c0_3 = arith.constant 0 : index
    %c0_4 = arith.constant 0 : index
    %4 = vector.load %arg3[%c0_3, %c0_4] : memref<1x4xf32, #tpu.memory_space<vmem>>, vector<1x4xf32>
    %5 = vector.broadcast %4 : vector<1x4xf32> to vector<512x4xf32>
    %6 = arith.addf %3, %5 : vector<512x4xf32>
    %7 = arith.truncf %6 : vector<512x4xf32> to vector<512x4xbf16>
    %c0_5 = arith.constant 0 : index
    %c0_6 = arith.constant 0 : index
    %8 = vector.load %arg4[%c0_5, %c0_6] : memref<512x4xbf16, #tpu.memory_space<vmem>>, vector<512x4xbf16>
    tpu.vector_store %arg4[%c0_5, %c0_6], %7 {strides = array<i32>} : memref<512x4xbf16, #tpu.memory_space<vmem>>, vector<512x4xbf16>,
    %cst_7 = arith.constant dense<0.000000e+00> : vector<4xf32>
    %9 = vector.multi_reduction <add>, %6, %cst_7 [0] : vector<512x4xf32> to vector<4xf32>
    %10 = vector.shape_cast %9 : vector<4xf32> to vector<1x4xf32>
    %cst_8 = arith.constant 5.120000e+02 : f32
    %11 = vector.broadcast %cst_8 : f32 to vector<1x4xf32>
    %12 = arith.divf %10, %11 : vector<1x4xf32>
    %13 = vector.broadcast %12 : vector<1x4xf32> to vector<512x4xf32>
    %14 = arith.subf %6, %13 : vector<512x4xf32>
    %15 = arith.mulf %14, %14 : vector<512x4xf32>
    %cst_9 = arith.constant dense<0.000000e+00> : vector<4xf32>
    %16 = vector.multi_reduction <add>, %15, %cst_9 [0] : vector<512x4xf32> to vector<4xf32>
    %17 = vector.shape_cast %16 : vector<4xf32> to vector<1x4xf32>
    %18 = tpu.concatenate %10, %17 in 0 : vector<1x4xf32>, vector<1x4xf32> -> vector<2x4xf32>
    %19 = vector.shape_cast %18 : vector<2x4xf32> to vector<1x2x4xf32>
    %c0_10 = arith.constant 0 : index
    %c0_11 = arith.constant 0 : index
    %c0_12 = arith.constant 0 : index
    %20 = vector.load %arg5[%c0_10, %c0_11, %c0_12] : memref<1x2x4xf32, #tpu.memory_space<vmem>>, vector<1x2x4xf32>
    tpu.vector_store %arg5[%c0_10, %c0_11, %c0_12], %19 {strides = array<i32>} : memref<1x2x4xf32, #tpu.memory_space<vmem>>, vector<1x2x4xf32>,
    return
  }
  func.func @transform_0(%arg0: i32) -> (i32, i32) {
    %c0_i32 = arith.constant 0 : i32
    %c0_i32_0 = arith.constant 0 : i32
    return %arg0, %c0_i32 : i32, i32
  }
  func.func @transform_1(%arg0: i32) -> (i32, i32) {
    %c0_i32 = arith.constant 0 : i32
    %c0_i32_0 = arith.constant 0 : i32
    %c0_i32_1 = arith.constant 0 : i32
    return %c0_i32, %c0_i32_0 : i32, i32
  }
  func.func @transform_2(%arg0: i32) -> (i32, i32) {
    %c0_i32 = arith.constant 0 : i32
    %c0_i32_0 = arith.constant 0 : i32
    %c0_i32_1 = arith.constant 0 : i32
    return %c0_i32, %c0_i32_0 : i32, i32
  }
  func.func @transform_3(%arg0: i32) -> (i32, i32) {
    %c0_i32 = arith.constant 0 : i32
    %c0_i32_0 = arith.constant 0 : i32
    return %arg0, %c0_i32 : i32, i32
  }
  func.func @transform_4(%arg0: i32) -> (i32, i32, i32) {
    %c0_i32 = arith.constant 0 : i32
    %c0_i32_0 = arith.constant 0 : i32
    %c0_i32_1 = arith.constant 0 : i32
    return %arg0, %c0_i32, %c0_i32_0 : i32, i32, i32
  }
}

</mosaic_0001>

<llo_original>
// kernel: tpu_custom_call.1
$region0: #{tpu_custom_call.1}
  #allocation0 [shape = 'u32[]', space=smem, size = 0x4, offset = 0x4, fixed_abs, tag = 'smem constant byte address 0x4 - core index']
  #allocation1 [shape = 'u32[144,128]{1,0:T(1,128)}', space=vmem, size = 0x12000, scoped, tag = 'internal scratch']
  %s0 = inlined_call_operand.vmem [shape: f32[512,16], index: 0, kind: input, shape index: {}]
  %s1 = inlined_call_operand.vmem [shape: bf16[16,4], index: 1, kind: input, shape index: {}]
  %s2 = inlined_call_operand.vmem [shape: f32[1,4], index: 2, kind: input, shape index: {}]
  %s3 = inlined_call_operand.vmem [shape: bf16[512,4], index: 3, kind: output, shape index: {0}]
  %s4 = inlined_call_operand.hbm [shape: f32[1,2,4], index: 4, kind: output, shape index: {1}]
  %5 = xla_tuple %s3, %s4
  %s6 = sld [smem:[#allocation0]]
  $region30: #{tpu_custom_call.1} parent=0
    _
  %s8 = ssub.s32 1, %s6
  %s9 = scalar_select 0, %s8, %s6
  $region1: #{tpu_custom_call.1} parent=0
    #allocation2 [shape = 'u8[1024]{0}', space=vmem, size = 0x400, scoped, tag = 'output window, operand 1, single buffered']
    #allocation3 [shape = 's32[1]{0}', space=sflag, size = 0x4, scoped, tag = 'scoped memory for tpu_custom_call.1']
    %10 = vsyncpa [#allocation3], 0
    // Predicated region
    $region2: #{tpu_custom_call.1} parent=1 // pred_check
      _
    $region3: #{tpu_custom_call.1} parent=1 // pred_check_branch
      %12 = sbr.rel (0) target = $region5
    $region4: #{tpu_custom_call.1} parent=1 // pred_region
      _
    $region5: #{tpu_custom_call.1} parent=1 // pred_fallthru
      _
    // Predicated region
    $region6: #{tpu_custom_call.1} parent=1 // pred_check
      _
    $region7: #{tpu_custom_call.1} parent=1 // pred_check_branch
      %14 = sbr.rel (0) target = $region9
    $region8: #{tpu_custom_call.1} parent=1 // pred_region
      _
    $region9: #{tpu_custom_call.1} parent=1 // pred_fallthru
      _
    // Predicated region
    $region10: #{tpu_custom_call.1} parent=1 // pred_check
      _
    $region11: #{tpu_custom_call.1} parent=1 // pred_check_branch
      %16 = sbr.rel (0) target = $region13
    $region12: #{tpu_custom_call.1} parent=1 // pred_region
      _
    $region13: #{tpu_custom_call.1} parent=1 // pred_fallthru
      _
    %v18 = vld [vmem:[%s0] sm:$0xff]
    %v19 = vld [vmem:[%s0 + $0x8] sm:$0xff]
    %v20 = vld [vmem:[%s0 + $0x10] sm:$0xff]
    %v21 = vld [vmem:[%s0 + $0x18] sm:$0xff]
    %v22 = vld [vmem:[%s0 + $0x20] sm:$0xff]
    %v23 = vld [vmem:[%s0 + $0x28] sm:$0xff]
    %v24 = vld [vmem:[%s0 + $0x30] sm:$0xff]
    %v25 = vld [vmem:[%s0 + $0x38] sm:$0xff]
    %v26 = vld [vmem:[%s0 + $0x40] sm:$0xff]
    %v27 = vld [vmem:[%s0 + $0x48] sm:$0xff]
    %v28 = vld [vmem:[%s0 + $0x50] sm:$0xff]
    %v29 = vld [vmem:[%s0 + $0x58] sm:$0xff]
    %v30 = vld [vmem:[%s0 + $0x60] sm:$0xff]
    %v31 = vld [vmem:[%s0 + $0x68] sm:$0xff]
    %v32 = vld [vmem:[%s0 + $0x70] sm:$0xff]
    %v33 = vld [vmem:[%s0 + $0x78] sm:$0xff]
    %v34 = vld [vmem:[%s0 + $0x80] sm:$0xff]
    %v35 = vld [vmem:[%s0 + $0x88] sm:$0xff]
    %v36 = vld [vmem:[%s0 + $0x90] sm:$0xff]
    %v37 = vld [vmem:[%s0 + $0x98] sm:$0xff]
    %v38 = vld [vmem:[%s0 + $0xa0] sm:$0xff]
    %v39 = vld [vmem:[%s0 + $0xa8] sm:$0xff]
    %v40 = vld [vmem:[%s0 + $0xb0] sm:$0xff]
    %v41 = vld [vmem:[%s0 + $0xb8] sm:$0xff]
    %v42 = vld [vmem:[%s0 + $0xc0] sm:$0xff]
    %v43 = vld [vmem:[%s0 + $0xc8] sm:$0xff]
    %v44 = vld [vmem:[%s0 + $0xd0] sm:$0xff]
    %v45 = vld [vmem:[%s0 + $0xd8] sm:$0xff]
    %v46 = vld [vmem:[%s0 + $0xe0] sm:$0xff]
    %v47 = vld [vmem:[%s0 + $0xe8] sm:$0xff]
    %v48 = vld [vmem:[%s0 + $0xf0] sm:$0xff]
    %v49 = vld [vmem:[%s0 + $0xf8] sm:$0xff]
    %v50 = vld [vmem:[%s0 + $0x100] sm:$0xff]
    %v51 = vld [vmem:[%s0 + $0x108] sm:$0xff]
    %v52 = vld [vmem:[%s0 + $0x110] sm:$0xff]
    %v53 = vld [vmem:[%s0 + $0x118] sm:$0xff]
    %v54 = vld [vmem:[%s0 + $0x120] sm:$0xff]
    %v55 = vld [vmem:[%s0 + $0x128] sm:$0xff]
    %v56 = vld [vmem:[%s0 + $0x130] sm:$0xff]
    %v57 = vld [vmem:[%s0 + $0x138] sm:$0xff]
    %v58 = vld [vmem:[%s0 + $0x140] sm:$0xff]
    %v59 = vld [vmem:[%s0 + $0x148] sm:$0xff]
    %v60 = vld [vmem:[%s0 + $0x150] sm:$0xff]
    %v61 = vld [vmem:[%s0 + $0x158] sm:$0xff]
    %v62 = vld [vmem:[%s0 + $0x160] sm:$0xff]
    %v63 = vld [vmem:[%s0 + $0x168] sm:$0xff]
    %v64 = vld [vmem:[%s0 + $0x170] sm:$0xff]
    %v65 = vld [vmem:[%s0 + $0x178] sm:$0xff]
    %v66 = vld [vmem:[%s0 + $0x180] sm:$0xff]
    %v67 = vld [vmem:[%s0 + $0x188] sm:$0xff]
    %v68 = vld [vmem:[%s0 + $0x190] sm:$0xff]
    %v69 = vld [vmem:[%s0 + $0x198] sm:$0xff]
    %v70 = vld [vmem:[%s0 + $0x1a0] sm:$0xff]
    %v71 = vld [vmem:[%s0 + $0x1a8] sm:$0xff]
    %v72 = vld [vmem:[%s0 + $0x1b0] sm:$0xff]
    %v73 = vld [vmem:[%s0 + $0x1b8] sm:$0xff]
    %v74 = vld [vmem:[%s0 + $0x1c0] sm:$0xff]
    %v75 = vld [vmem:[%s0 + $0x1c8] sm:$0xff]
    %v76 = vld [vmem:[%s0 + $0x1d0] sm:$0xff]
    %v77 = vld [vmem:[%s0 + $0x1d8] sm:$0xff]
    %v78 = vld [vmem:[%s0 + $0x1e0] sm:$0xff]
    %v79 = vld [vmem:[%s0 + $0x1e8] sm:$0xff]
    %v80 = vld [vmem:[%s0 + $0x1f0] sm:$0xff]
    %v81 = vld [vmem:[%s0 + $0x1f8] sm:$0xff]
    %v82 = vpack.c.bf16 %v19, %v18
    %v83 = vpack.c.bf16 %v21, %v20
    %v84 = vpack.c.bf16 %v23, %v22
    %v85 = vpack.c.bf16 %v25, %v24
    %v86 = vpack.c.bf16 %v27, %v26
    %v87 = vpack.c.bf16 %v29, %v28
    %v88 = vpack.c.bf16 %v31, %v30
    %v89 = vpack.c.bf16 %v33, %v32
    %v90 = vpack.c.bf16 %v35, %v34
    %v91 = vpack.c.bf16 %v37, %v36
    %v92 = vpack.c.bf16 %v39, %v38
    %v93 = vpack.c.bf16 %v41, %v40
    %v94 = vpack.c.bf16 %v43, %v42
    %v95 = vpack.c.bf16 %v45, %v44
    %v96 = vpack.c.bf16 %v47, %v46
    %v97 = vpack.c.bf16 %v49, %v48
    %v98 = vpack.c.bf16 %v51, %v50
    %v99 = vpack.c.bf16 %v53, %v52
    %v100 = vpack.c.bf16 %v55, %v54
    %v101 = vpack.c.bf16 %v57, %v56
    %v102 = vpack.c.bf16 %v59, %v58
    %v103 = vpack.c.bf16 %v61, %v60
    %v104 = vpack.c.bf16 %v63, %v62
    %v105 = vpack.c.bf16 %v65, %v64
    %v106 = vpack.c.bf16 %v67, %v66
    %v107 = vpack.c.bf16 %v69, %v68
    %v108 = vpack.c.bf16 %v71, %v70
    %v109 = vpack.c.bf16 %v73, %v72
    %v110 = vpack.c.bf16 %v75, %v74
    %v111 = vpack.c.bf16 %v77, %v76
    %v112 = vpack.c.bf16 %v79, %v78
    %v113 = vpack.c.bf16 %v81, %v80
    %v114 = vld [vmem:[%s1] sm:$0xf]
    %v115 = vld [vmem:[%s1 + $0x4] sm:$0xf]
    %v116 = vld [vmem:[%s2] sm:$0x1]
    %v118 = vlaneseq
    %v119 = vshrl.u32 %v118, 7
    %v120 = vsub.s32 0, %v119
    %v121 = vrot.slane %v116, %v120
    %v125 = vunpack.c.l.b16 %v114
    %v126 = vunpack.c.l.b16 %v115
    %v127 = vpack.c.b16 %v126, %v125
    %vm129 = vcmask 130048
    %v131 = vsel %vm129, %v82, 0
    %v134 = vsel %vm129, %v83, 0
    %v137 = vsel %vm129, %v84, 0
    %v140 = vsel %vm129, %v85, 0
    %v143 = vsel %vm129, %v86, 0
    %v146 = vsel %vm129, %v87, 0
    %v149 = vsel %vm129, %v88, 0
    %v152 = vsel %vm129, %v89, 0
    %v155 = vsel %vm129, %v90, 0
    %v158 = vsel %vm129, %v91, 0
    %v161 = vsel %vm129, %v92, 0
    %v164 = vsel %vm129, %v93, 0
    %v167 = vsel %vm129, %v94, 0
    %v170 = vsel %vm129, %v95, 0
    %v173 = vsel %vm129, %v96, 0
    %v176 = vsel %vm129, %v97, 0
    %v179 = vsel %vm129, %v98, 0
    %v182 = vsel %vm129, %v99, 0
    %v185 = vsel %vm129, %v100, 0
    %v188 = vsel %vm129, %v101, 0
    %v191 = vsel %vm129, %v102, 0
    %v194 = vsel %vm129, %v103, 0
    %v197 = vsel %vm129, %v104, 0
    %v200 = vsel %vm129, %v105, 0
    %v203 = vsel %vm129, %v106, 0
    %v206 = vsel %vm129, %v107, 0
    %v209 = vsel %vm129, %v108, 0
    %v212 = vsel %vm129, %v109, 0
    %v215 = vsel %vm129, %v110, 0
    %v218 = vsel %vm129, %v111, 0
    %v221 = vsel %vm129, %v112, 0
    %v224 = vsel %vm129, %v113, 0
    %226 = vmatprep.subr.bf16.mxu0 0
    %227 = vmatpush1.bf16.msra.mxu0 0
    %228 = vmatprep.subr.bf16.mxu0 0
    %229 = vmatpush1.bf16.msra.mxu0 0
    %230 = vmatprep.subr.bf16.mxu0 0
    %231 = vmatpush1.bf16.msra.mxu0 0
    %232 = vmatprep.subr.bf16.mxu0 0
    %233 = vmatpush1.bf16.msra.mxu0 0
    %234 = vmatprep.subr.bf16.mxu0 0
    %235 = vmatpush1.bf16.msra.mxu0 0
    %236 = vmatprep.subr.bf16.mxu0 0
    %237 = vmatpush1.bf16.msra.mxu0 0
    %238 = vmatprep.subr.bf16.mxu0 0
    %239 = vmatpush1.bf16.msra.mxu0 0
    %240 = vmatprep.subr.bf16.mxu0 0
    %241 = vmatpush1.bf16.msra.mxu0 %v127
    %242 = vmatprep.subr.bf16.mxu0 0
    %243 = vmatpush2.bf16.msra.mxu0 0
    %244 = vmatprep.subr.bf16.mxu0 0
    %245 = vmatpush2.bf16.msra.mxu0 0
    %246 = vmatprep.subr.bf16.mxu0 0
    %247 = vmatpush2.bf16.msra.mxu0 0
    %248 = vmatprep.subr.bf16.mxu0 0
    %249 = vmatpush2.bf16.msra.mxu0 0
    %250 = vmatprep.subr.bf16.mxu0 0
    %251 = vmatpush2.bf16.msra.mxu0 0
    %252 = vmatprep.subr.bf16.mxu0 0
    %253 = vmatpush2.bf16.msra.mxu0 0
    %254 = vmatprep.subr.bf16.mxu0 0
    %255 = vmatpush2.bf16.msra.mxu0 0
    %256 = vmatprep.subr.bf16.mxu0 0
    %257 = vmatpush2.bf16.msra.mxu0 0
    %258 = vmatprep.mubr.bf16.mxu0 0
    %259 = vmatmul.mubr.bf16.gmra.mxu0 %v131
    %v260 = vpop.f32.mrf.mxu0
    %v261 = vadd.f32 %v121, %v260
    %v262 = vpop.f32.mrf.mxu0
    %v263 = vpop.f32.mrf.mxu0
    %v264 = vadd.f32 %v121, %v263
    %v265 = vpop.f32.mrf.mxu0
    %266 = vmatprep.mubr.bf16.mxu0 0
    %267 = vmatmul.mubr.bf16.gmra.mxu0 %v134
    %v268 = vpop.f32.mrf.mxu0
    %v269 = vadd.f32 %v121, %v268
    %v270 = vpop.f32.mrf.mxu0
    %v271 = vpop.f32.mrf.mxu0
    %v272 = vadd.f32 %v121, %v271
    %v273 = vpop.f32.mrf.mxu0
    %274 = vmatprep.mubr.bf16.mxu0 0
    %275 = vmatmul.mubr.bf16.gmra.mxu0 %v137
    %v276 = vpop.f32.mrf.mxu0
    %v277 = vadd.f32 %v121, %v276
    %v278 = vpop.f32.mrf.mxu0
    %v279 = vpop.f32.mrf.mxu0
    %v280 = vadd.f32 %v121, %v279
    %v281 = vpop.f32.mrf.mxu0
    %282 = vmatprep.mubr.bf16.mxu0 0
    %283 = vmatmul.mubr.bf16.gmra.mxu0 %v140
    %v284 = vpop.f32.mrf.mxu0
    %v285 = vadd.f32 %v121, %v284
    %v286 = vpop.f32.mrf.mxu0
    %v287 = vpop.f32.mrf.mxu0
    %v288 = vadd.f32 %v121, %v287
    %v289 = vpop.f32.mrf.mxu0
    %290 = vmatprep.mubr.bf16.mxu0 0
    %291 = vmatmul.mubr.bf16.gmra.mxu0 %v143
    %v292 = vpop.f32.mrf.mxu0
    %v293 = vadd.f32 %v121, %v292
    %v294 = vpop.f32.mrf.mxu0
    %v295 = vpop.f32.mrf.mxu0
    %v296 = vadd.f32 %v121, %v295
    %v297 = vpop.f32.mrf.mxu0
    %298 = vmatprep.mubr.bf16.mxu0 0
    %299 = vmatmul.mubr.bf16.gmra.mxu0 %v146
    %v300 = vpop.f32.mrf.mxu0
    %v301 = vadd.f32 %v121, %v300
    %v302 = vpop.f32.mrf.mxu0
    %v303 = vpop.f32.mrf.mxu0
    %v304 = vadd.f32 %v121, %v303
    %v305 = vpop.f32.mrf.mxu0
    %306 = vmatprep.mubr.bf16.mxu0 0
    %307 = vmatmul.mubr.bf16.gmra.mxu0 %v149
    %v308 = vpop.f32.mrf.mxu0
    %v309 = vadd.f32 %v121, %v308
    %v310 = vpop.f32.mrf.mxu0
    %v311 = vpop.f32.mrf.mxu0
    %v312 = vadd.f32 %v121, %v311
    %v313 = vpop.f32.mrf.mxu0
    %314 = vmatprep.mubr.bf16.mxu0 0
    %315 = vmatmul.mubr.bf16.gmra.mxu0 %v152
    %v316 = vpop.f32.mrf.mxu0
    %v317 = vadd.f32 %v121, %v316
    %v318 = vpop.f32.mrf.mxu0
    %v319 = vpop.f32.mrf.mxu0
    %v320 = vadd.f32 %v121, %v319
    %v321 = vpop.f32.mrf.mxu0
    %322 = vmatprep.mubr.bf16.mxu0 0
    %323 = vmatmul.mubr.bf16.gmra.mxu0 %v155
    %v324 = vpop.f32.mrf.mxu0
    %v325 = vadd.f32 %v121, %v324
    %v326 = vpop.f32.mrf.mxu0
    %v327 = vpop.f32.mrf.mxu0
    %v328 = vadd.f32 %v121, %v327
    %v329 = vpop.f32.mrf.mxu0
    %330 = vmatprep.mubr.bf16.mxu0 0
    %331 = vmatmul.mubr.bf16.gmra.mxu0 %v158
    %v332 = vpop.f32.mrf.mxu0
    %v333 = vadd.f32 %v121, %v332
    %v334 = vpop.f32.mrf.mxu0
    %v335 = vpop.f32.mrf.mxu0
    %v336 = vadd.f32 %v121, %v335
    %v337 = vpop.f32.mrf.mxu0
    %338 = vmatprep.mubr.bf16.mxu0 0
    %339 = vmatmul.mubr.bf16.gmra.mxu0 %v161
    %v340 = vpop.f32.mrf.mxu0
    %v341 = vadd.f32 %v121, %v340
    %v342 = vpop.f32.mrf.mxu0
    %v343 = vpop.f32.mrf.mxu0
    %v344 = vadd.f32 %v121, %v343
    %v345 = vpop.f32.mrf.mxu0
    %346 = vmatprep.mubr.bf16.mxu0 0
    %347 = vmatmul.mubr.bf16.gmra.mxu0 %v164
    %v348 = vpop.f32.mrf.mxu0
    %v349 = vadd.f32 %v121, %v348
    %v350 = vpop.f32.mrf.mxu0
    %v351 = vpop.f32.mrf.mxu0
    %v352 = vadd.f32 %v121, %v351
    %v353 = vpop.f32.mrf.mxu0
    %354 = vmatprep.mubr.bf16.mxu0 0
    %355 = vmatmul.mubr.bf16.gmra.mxu0 %v167
    %v356 = vpop.f32.mrf.mxu0
    %v357 = vadd.f32 %v121, %v356
    %v358 = vpop.f32.mrf.mxu0
    %v359 = vpop.f32.mrf.mxu0
    %v360 = vadd.f32 %v121, %v359
    %v361 = vpop.f32.mrf.mxu0
    %362 = vmatprep.mubr.bf16.mxu0 0
    %363 = vmatmul.mubr.bf16.gmra.mxu0 %v170
    %v364 = vpop.f32.mrf.mxu0
    %v365 = vadd.f32 %v121, %v364
    %v366 = vpop.f32.mrf.mxu0
    %v367 = vpop.f32.mrf.mxu0
    %v368 = vadd.f32 %v121, %v367
    %v369 = vpop.f32.mrf.mxu0
    %370 = vmatprep.mubr.bf16.mxu0 0
    %371 = vmatmul.mubr.bf16.gmra.mxu0 %v173
    %v372 = vpop.f32.mrf.mxu0
    %v373 = vadd.f32 %v121, %v372
    %v374 = vpop.f32.mrf.mxu0
    %v375 = vpop.f32.mrf.mxu0
    %v376 = vadd.f32 %v121, %v375
    %v377 = vpop.f32.mrf.mxu0
    %378 = vmatprep.mubr.bf16.mxu0 0
    %379 = vmatmul.mubr.bf16.gmra.mxu0 %v176
    %v380 = vpop.f32.mrf.mxu0
    %v381 = vadd.f32 %v121, %v380
    %v382 = vpop.f32.mrf.mxu0
    %v383 = vpop.f32.mrf.mxu0
    %v384 = vadd.f32 %v121, %v383
    %v385 = vpop.f32.mrf.mxu0
    %386 = vmatprep.mubr.bf16.mxu0 0
    %387 = vmatmul.mubr.bf16.gmra.mxu0 %v179
    %v388 = vpop.f32.mrf.mxu0
    %v389 = vadd.f32 %v121, %v388
    %v390 = vpop.f32.mrf.mxu0
    %v391 = vpop.f32.mrf.mxu0
    %v392 = vadd.f32 %v121, %v391
    %v393 = vpop.f32.mrf.mxu0
    %394 = vmatprep.mubr.bf16.mxu0 0
    %395 = vmatmul.mubr.bf16.gmra.mxu0 %v182
    %v396 = vpop.f32.mrf.mxu0
    %v397 = vadd.f32 %v121, %v396
    %v398 = vpop.f32.mrf.mxu0
    %v399 = vpop.f32.mrf.mxu0
    %v400 = vadd.f32 %v121, %v399
    %v401 = vpop.f32.mrf.mxu0
    %402 = vmatprep.mubr.bf16.mxu0 0
    %403 = vmatmul.mubr.bf16.gmra.mxu0 %v185
    %v404 = vpop.f32.mrf.mxu0
    %v405 = vadd.f32 %v121, %v404
    %v406 = vpop.f32.mrf.mxu0
    %v407 = vpop.f32.mrf.mxu0
    %v408 = vadd.f32 %v121, %v407
    %v409 = vpop.f32.mrf.mxu0
    %410 = vmatprep.mubr.bf16.mxu0 0
    %411 = vmatmul.mubr.bf16.gmra.mxu0 %v188
    %v412 = vpop.f32.mrf.mxu0
    %v413 = vadd.f32 %v121, %v412
    %v414 = vpop.f32.mrf.mxu0
    %v415 = vpop.f32.mrf.mxu0
    %v416 = vadd.f32 %v121, %v415
    %v417 = vpop.f32.mrf.mxu0
    %418 = vmatprep.mubr.bf16.mxu0 0
    %419 = vmatmul.mubr.bf16.gmra.mxu0 %v191
    %v420 = vpop.f32.mrf.mxu0
    %v421 = vadd.f32 %v121, %v420
    %v422 = vpop.f32.mrf.mxu0
    %v423 = vpop.f32.mrf.mxu0
    %v424 = vadd.f32 %v121, %v423
    %v425 = vpop.f32.mrf.mxu0
    %426 = vmatprep.mubr.bf16.mxu0 0
    %427 = vmatmul.mubr.bf16.gmra.mxu0 %v194
    %v428 = vpop.f32.mrf.mxu0
    %v429 = vadd.f32 %v121, %v428
    %v430 = vpop.f32.mrf.mxu0
    %v431 = vpop.f32.mrf.mxu0
    %v432 = vadd.f32 %v121, %v431
    %v433 = vpop.f32.mrf.mxu0
    %434 = vmatprep.mubr.bf16.mxu0 0
    %435 = vmatmul.mubr.bf16.gmra.mxu0 %v197
    %v436 = vpop.f32.mrf.mxu0
    %v437 = vadd.f32 %v121, %v436
    %v438 = vpop.f32.mrf.mxu0
    %v439 = vpop.f32.mrf.mxu0
    %v440 = vadd.f32 %v121, %v439
    %v441 = vpop.f32.mrf.mxu0
    %442 = vmatprep.mubr.bf16.mxu0 0
    %443 = vmatmul.mubr.bf16.gmra.mxu0 %v200
    %v444 = vpop.f32.mrf.mxu0
    %v445 = vadd.f32 %v121, %v444
    %v446 = vpop.f32.mrf.mxu0
    %v447 = vpop.f32.mrf.mxu0
    %v448 = vadd.f32 %v121, %v447
    %v449 = vpop.f32.mrf.mxu0
    %450 = vmatprep.mubr.bf16.mxu0 0
    %451 = vmatmul.mubr.bf16.gmra.mxu0 %v203
    %v452 = vpop.f32.mrf.mxu0
    %v453 = vadd.f32 %v121, %v452
    %v454 = vpop.f32.mrf.mxu0
    %v455 = vpop.f32.mrf.mxu0
    %v456 = vadd.f32 %v121, %v455
    %v457 = vpop.f32.mrf.mxu0
    %458 = vmatprep.mubr.bf16.mxu0 0
    %459 = vmatmul.mubr.bf16.gmra.mxu0 %v206
    %v460 = vpop.f32.mrf.mxu0
    %v461 = vadd.f32 %v121, %v460
    %v462 = vpop.f32.mrf.mxu0
    %v463 = vpop.f32.mrf.mxu0
    %v464 = vadd.f32 %v121, %v463
    %v465 = vpop.f32.mrf.mxu0
    %466 = vmatprep.mubr.bf16.mxu0 0
    %467 = vmatmul.mubr.bf16.gmra.mxu0 %v209
    %v468 = vpop.f32.mrf.mxu0
    %v469 = vadd.f32 %v121, %v468
    %v470 = vpop.f32.mrf.mxu0
    %v471 = vpop.f32.mrf.mxu0
    %v472 = vadd.f32 %v121, %v471
    %v473 = vpop.f32.mrf.mxu0
    %474 = vmatprep.mubr.bf16.mxu0 0
    %475 = vmatmul.mubr.bf16.gmra.mxu0 %v212
    %v476 = vpop.f32.mrf.mxu0
    %v477 = vadd.f32 %v121, %v476
    %v478 = vpop.f32.mrf.mxu0
    %v479 = vpop.f32.mrf.mxu0
    %v480 = vadd.f32 %v121, %v479
    %v481 = vpop.f32.mrf.mxu0
    %482 = vmatprep.mubr.bf16.mxu0 0
    %483 = vmatmul.mubr.bf16.gmra.mxu0 %v215
    %v484 = vpop.f32.mrf.mxu0
    %v485 = vadd.f32 %v121, %v484
    %v486 = vpop.f32.mrf.mxu0
    %v487 = vpop.f32.mrf.mxu0
    %v488 = vadd.f32 %v121, %v487
    %v489 = vpop.f32.mrf.mxu0
    %490 = vmatprep.mubr.bf16.mxu0 0
    %491 = vmatmul.mubr.bf16.gmra.mxu0 %v218
    %v492 = vpop.f32.mrf.mxu0
    %v493 = vadd.f32 %v121, %v492
    %v494 = vpop.f32.mrf.mxu0
    %v495 = vpop.f32.mrf.mxu0
    %v496 = vadd.f32 %v121, %v495
    %v497 = vpop.f32.mrf.mxu0
    %498 = vmatprep.mubr.bf16.mxu0 0
    %499 = vmatmul.mubr.bf16.gmra.mxu0 %v221
    %v500 = vpop.f32.mrf.mxu0
    %v501 = vadd.f32 %v121, %v500
    %v502 = vpop.f32.mrf.mxu0
    %v503 = vpop.f32.mrf.mxu0
    %v504 = vadd.f32 %v121, %v503
    %v505 = vpop.f32.mrf.mxu0
    %506 = vmatprep.mubr.bf16.mxu0 0
    %507 = vmatmul.mubr.bf16.gmra.mxu0 %v224
    %v508 = vpop.f32.mrf.mxu0
    %v509 = vadd.f32 %v121, %v508
    %v510 = vpop.f32.mrf.mxu0
    %v511 = vpop.f32.mrf.mxu0
    %v512 = vadd.f32 %v121, %v511
    %v513 = vpop.f32.mrf.mxu0
    %514 = vdwg.mxu0
    %v515 = vpack.c.bf16 %v264, %v261
    %v516 = vpack.c.bf16 %v272, %v269
    %v517 = vpack.c.bf16 %v280, %v277
    %v518 = vpack.c.bf16 %v288, %v285
    %v519 = vpack.c.bf16 %v296, %v293
    %v520 = vpack.c.bf16 %v304, %v301
    %v521 = vpack.c.bf16 %v312, %v309
    %v522 = vpack.c.bf16 %v320, %v317
    %v523 = vpack.c.bf16 %v328, %v325
    %v524 = vpack.c.bf16 %v336, %v333
    %v525 = vpack.c.bf16 %v344, %v341
    %v526 = vpack.c.bf16 %v352, %v349
    %v527 = vpack.c.bf16 %v360, %v357
    %v528 = vpack.c.bf16 %v368, %v365
    %v529 = vpack.c.bf16 %v376, %v373
    %v530 = vpack.c.bf16 %v384, %v381
    %v531 = vpack.c.bf16 %v392, %v389
    %v532 = vpack.c.bf16 %v400, %v397
    %v533 = vpack.c.bf16 %v408, %v405
    %v534 = vpack.c.bf16 %v416, %v413
    %v535 = vpack.c.bf16 %v424, %v421
    %v536 = vpack.c.bf16 %v432, %v429
    %v537 = vpack.c.bf16 %v440, %v437
    %v538 = vpack.c.bf16 %v448, %v445
    %v539 = vpack.c.bf16 %v456, %v453
    %v540 = vpack.c.bf16 %v464, %v461
    %v541 = vpack.c.bf16 %v472, %v469
    %v542 = vpack.c.bf16 %v480, %v477
    %v543 = vpack.c.bf16 %v488, %v485
    %v544 = vpack.c.bf16 %v496, %v493
    %v545 = vpack.c.bf16 %v504, %v501
    %v546 = vpack.c.bf16 %v512, %v509
    %v579 = vunpack.c.l.b16 %v515
    %v580 = vunpack.c.h.b16 %v515
    %v581 = vunpack.c.l.b16 %v516
    %v582 = vunpack.c.h.b16 %v516
    %v583 = vunpack.c.l.b16 %v517
    %v584 = vunpack.c.h.b16 %v517
    %v585 = vunpack.c.l.b16 %v518
    %v586 = vunpack.c.h.b16 %v518
    %v587 = vunpack.c.l.b16 %v519
    %v588 = vunpack.c.h.b16 %v519
    %v589 = vunpack.c.l.b16 %v520
    %v590 = vunpack.c.h.b16 %v520
    %v591 = vunpack.c.l.b16 %v521
    %v592 = vunpack.c.h.b16 %v521
    %v593 = vunpack.c.l.b16 %v522
    %v594 = vunpack.c.h.b16 %v522
    %v595 = vunpack.c.l.b16 %v523
    %v596 = vunpack.c.h.b16 %v523
    %v597 = vunpack.c.l.b16 %v524
    %v598 = vunpack.c.h.b16 %v524
    %v599 = vunpack.c.l.b16 %v525
    %v600 = vunpack.c.h.b16 %v525
    %v601 = vunpack.c.l.b16 %v526
    %v602 = vunpack.c.h.b16 %v526
    %v603 = vunpack.c.l.b16 %v527
    %v604 = vunpack.c.h.b16 %v527
    %v605 = vunpack.c.l.b16 %v528
    %v606 = vunpack.c.h.b16 %v528
    %v607 = vunpack.c.l.b16 %v529
    %v608 = vunpack.c.h.b16 %v529
    %v609 = vunpack.c.l.b16 %v530
    %v610 = vunpack.c.h.b16 %v530
    %v611 = vunpack.c.l.b16 %v531
    %v612 = vunpack.c.h.b16 %v531
    %v613 = vunpack.c.l.b16 %v532
    %v614 = vunpack.c.h.b16 %v532
    %v615 = vunpack.c.l.b16 %v533
    %v616 = vunpack.c.h.b16 %v533
    %v617 = vunpack.c.l.b16 %v534
    %v618 = vunpack.c.h.b16 %v534
    %v619 = vunpack.c.l.b16 %v535
    %v620 = vunpack.c.h.b16 %v535
    %v621 = vunpack.c.l.b16 %v536
    %v622 = vunpack.c.h.b16 %v536
    %v623 = vunpack.c.l.b16 %v537
    %v624 = vunpack.c.h.b16 %v537
    %v625 = vunpack.c.l.b16 %v538
    %v626 = vunpack.c.h.b16 %v538
    %v627 = vunpack.c.l.b16 %v539
    %v628 = vunpack.c.h.b16 %v539
    %v629 = vunpack.c.l.b16 %v540
    %v630 = vunpack.c.h.b16 %v540
    %v631 = vunpack.c.l.b16 %v541
    %v632 = vunpack.c.h.b16 %v541
    %v633 = vunpack.c.l.b16 %v542
    %v634 = vunpack.c.h.b16 %v542
    %v635 = vunpack.c.l.b16 %v543
    %v636 = vunpack.c.h.b16 %v543
    %v637 = vunpack.c.l.b16 %v544
    %v638 = vunpack.c.h.b16 %v544
    %v639 = vunpack.c.l.b16 %v545
    %v640 = vunpack.c.h.b16 %v545
    %v641 = vunpack.c.l.b16 %v546
    %v642 = vunpack.c.h.b16 %v546
    %v643 = vpack.c.b16 %v579, %v579
    %v644 = vpack.c.b16 %v580, %v580
    %v645 = vpack.c.b16 %v581, %v581
    %v646 = vpack.c.b16 %v582, %v582
    %v647 = vpack.c.b16 %v583, %v583
    %v648 = vpack.c.b16 %v584, %v584
    %v649 = vpack.c.b16 %v585, %v585
    %v650 = vpack.c.b16 %v586, %v586
    %v651 = vpack.c.b16 %v587, %v587
    %v652 = vpack.c.b16 %v588, %v588
    %v653 = vpack.c.b16 %v589, %v589
    %v654 = vpack.c.b16 %v590, %v590
    %v655 = vpack.c.b16 %v591, %v591
    %v656 = vpack.c.b16 %v592, %v592
    %v657 = vpack.c.b16 %v593, %v593
    %v658 = vpack.c.b16 %v594, %v594
    %v659 = vpack.c.b16 %v595, %v595
    %v660 = vpack.c.b16 %v596, %v596
    %v661 = vpack.c.b16 %v597, %v597
    %v662 = vpack.c.b16 %v598, %v598
    %v663 = vpack.c.b16 %v599, %v599
    %v664 = vpack.c.b16 %v600, %v600
    %v665 = vpack.c.b16 %v601, %v601
    %v666 = vpack.c.b16 %v602, %v602
    %v667 = vpack.c.b16 %v603, %v603
    %v668 = vpack.c.b16 %v604, %v604
    %v669 = vpack.c.b16 %v605, %v605
    %v670 = vpack.c.b16 %v606, %v606
    %v671 = vpack.c.b16 %v607, %v607
    %v672 = vpack.c.b16 %v608, %v608
    %v673 = vpack.c.b16 %v609, %v609
    %v674 = vpack.c.b16 %v610, %v610
    %v675 = vpack.c.b16 %v611, %v611
    %v676 = vpack.c.b16 %v612, %v612
    %v677 = vpack.c.b16 %v613, %v613
    %v678 = vpack.c.b16 %v614, %v614
    %v679 = vpack.c.b16 %v615, %v615
    %v680 = vpack.c.b16 %v616, %v616
    %v681 = vpack.c.b16 %v617, %v617
    %v682 = vpack.c.b16 %v618, %v618
    %v683 = vpack.c.b16 %v619, %v619
    %v684 = vpack.c.b16 %v620, %v620
    %v685 = vpack.c.b16 %v621, %v621
    %v686 = vpack.c.b16 %v622, %v622
    %v687 = vpack.c.b16 %v623, %v623
    %v688 = vpack.c.b16 %v624, %v624
    %v689 = vpack.c.b16 %v625, %v625
    %v690 = vpack.c.b16 %v626, %v626
    %v691 = vpack.c.b16 %v627, %v627
    %v692 = vpack.c.b16 %v628, %v628
    %v693 = vpack.c.b16 %v629, %v629
    %v694 = vpack.c.b16 %v630, %v630
    %v695 = vpack.c.b16 %v631, %v631
    %v696 = vpack.c.b16 %v632, %v632
    %v697 = vpack.c.b16 %v633, %v633
    %v698 = vpack.c.b16 %v634, %v634
    %v699 = vpack.c.b16 %v635, %v635
    %v700 = vpack.c.b16 %v636, %v636
    %v701 = vpack.c.b16 %v637, %v637
    %v702 = vpack.c.b16 %v638, %v638
    %v703 = vpack.c.b16 %v639, %v639
    %v704 = vpack.c.b16 %v640, %v640
    %v705 = vpack.c.b16 %v641, %v641
    %v706 = vpack.c.b16 %v642, %v642
    %vm771 = vcmask 27648
    %772 = vst.msk [vmem:[%s3] sm:$0xf] %vm771, %v643
    %773 = vst.msk [vmem:[%s3 + $0x4] sm:$0xf] %vm771, %v644
    %774 = vst.msk [vmem:[%s3 + $0x8] sm:$0xf] %vm771, %v645
    %775 = vst.msk [vmem:[%s3 + $0xc] sm:$0xf] %vm771, %v646
    %776 = vst.msk [vmem:[%s3 + $0x10] sm:$0xf] %vm771, %v647
    %777 = vst.msk [vmem:[%s3 + $0x14] sm:$0xf] %vm771, %v648
    %778 = vst.msk [vmem:[%s3 + $0x18] sm:$0xf] %vm771, %v649
    %779 = vst.msk [vmem:[%s3 + $0x1c] sm:$0xf] %vm771, %v650
    %780 = vst.msk [vmem:[%s3 + $0x20] sm:$0xf] %vm771, %v651
    %781 = vst.msk [vmem:[%s3 + $0x24] sm:$0xf] %vm771, %v652
    %782 = vst.msk [vmem:[%s3 + $0x28] sm:$0xf] %vm771, %v653
    %783 = vst.msk [vmem:[%s3 + $0x2c] sm:$0xf] %vm771, %v654
    %784 = vst.msk [vmem:[%s3 + $0x30] sm:$0xf] %vm771, %v655
    %785 = vst.msk [vmem:[%s3 + $0x34] sm:$0xf] %vm771, %v656
    %786 = vst.msk [vmem:[%s3 + $0x38] sm:$0xf] %vm771, %v657
    %787 = vst.msk [vmem:[%s3 + $0x3c] sm:$0xf] %vm771, %v658
    %788 = vst.msk [vmem:[%s3 + $0x40] sm:$0xf] %vm771, %v659
    %789 = vst.msk [vmem:[%s3 + $0x44] sm:$0xf] %vm771, %v660
    %790 = vst.msk [vmem:[%s3 + $0x48] sm:$0xf] %vm771, %v661
    %791 = vst.msk [vmem:[%s3 + $0x4c] sm:$0xf] %vm771, %v662
    %792 = vst.msk [vmem:[%s3 + $0x50] sm:$0xf] %vm771, %v663
    %793 = vst.msk [vmem:[%s3 + $0x54] sm:$0xf] %vm771, %v664
    %794 = vst.msk [vmem:[%s3 + $0x58] sm:$0xf] %vm771, %v665
    %795 = vst.msk [vmem:[%s3 + $0x5c] sm:$0xf] %vm771, %v666
    %796 = vst.msk [vmem:[%s3 + $0x60] sm:$0xf] %vm771, %v667
    %797 = vst.msk [vmem:[%s3 + $0x64] sm:$0xf] %vm771, %v668
    %798 = vst.msk [vmem:[%s3 + $0x68] sm:$0xf] %vm771, %v669
    %799 = vst.msk [vmem:[%s3 + $0x6c] sm:$0xf] %vm771, %v670
    %800 = vst.msk [vmem:[%s3 + $0x70] sm:$0xf] %vm771, %v671
    %801 = vst.msk [vmem:[%s3 + $0x74] sm:$0xf] %vm771, %v672
    %802 = vst.msk [vmem:[%s3 + $0x78] sm:$0xf] %vm771, %v673
    %803 = vst.msk [vmem:[%s3 + $0x7c] sm:$0xf] %vm771, %v674
    %804 = vst.msk [vmem:[%s3 + $0x80] sm:$0xf] %vm771, %v675
    %805 = vst.msk [vmem:[%s3 + $0x84] sm:$0xf] %vm771, %v676
    %806 = vst.msk [vmem:[%s3 + $0x88] sm:$0xf] %vm771, %v677
    %807 = vst.msk [vmem:[%s3 + $0x8c] sm:$0xf] %vm771, %v678
    %808 = vst.msk [vmem:[%s3 + $0x90] sm:$0xf] %vm771, %v679
    %809 = vst.msk [vmem:[%s3 + $0x94] sm:$0xf] %vm771, %v680
    %810 = vst.msk [vmem:[%s3 + $0x98] sm:$0xf] %vm771, %v681
    %811 = vst.msk [vmem:[%s3 + $0x9c] sm:$0xf] %vm771, %v682
    %812 = vst.msk [vmem:[%s3 + $0xa0] sm:$0xf] %vm771, %v683
    %813 = vst.msk [vmem:[%s3 + $0xa4] sm:$0xf] %vm771, %v684
    %814 = vst.msk [vmem:[%s3 + $0xa8] sm:$0xf] %vm771, %v685
    %815 = vst.msk [vmem:[%s3 + $0xac] sm:$0xf] %vm771, %v686
    %816 = vst.msk [vmem:[%s3 + $0xb0] sm:$0xf] %vm771, %v687
    %817 = vst.msk [vmem:[%s3 + $0xb4] sm:$0xf] %vm771, %v688
    %818 = vst.msk [vmem:[%s3 + $0xb8] sm:$0xf] %vm771, %v689
    %819 = vst.msk [vmem:[%s3 + $0xbc] sm:$0xf] %vm771, %v690
    %820 = vst.msk [vmem:[%s3 + $0xc0] sm:$0xf] %vm771, %v691
    %821 = vst.msk [vmem:[%s3 + $0xc4] sm:$0xf] %vm771, %v692
    %822 = vst.msk [vmem:[%s3 + $0xc8] sm:$0xf] %vm771, %v693
    %823 = vst.msk [vmem:[%s3 + $0xcc] sm:$0xf] %vm771, %v694
    %824 = vst.msk [vmem:[%s3 + $0xd0] sm:$0xf] %vm771, %v695
    %825 = vst.msk [vmem:[%s3 + $0xd4] sm:$0xf] %vm771, %v696
    %826 = vst.msk [vmem:[%s3 + $0xd8] sm:$0xf] %vm771, %v697
    %827 = vst.msk [vmem:[%s3 + $0xdc] sm:$0xf] %vm771, %v698
    %828 = vst.msk [vmem:[%s3 + $0xe0] sm:$0xf] %vm771, %v699
    %829 = vst.msk [vmem:[%s3 + $0xe4] sm:$0xf] %vm771, %v700
    %830 = vst.msk [vmem:[%s3 + $0xe8] sm:$0xf] %vm771, %v701
    %831 = vst.msk [vmem:[%s3 + $0xec] sm:$0xf] %vm771, %v702
    %832 = vst.msk [vmem:[%s3 + $0xf0] sm:$0xf] %vm771, %v703
    %833 = vst.msk [vmem:[%s3 + $0xf4] sm:$0xf] %vm771, %v704
    %834 = vst.msk [vmem:[%s3 + $0xf8] sm:$0xf] %vm771, %v705
    %835 = vst.msk [vmem:[%s3 + $0xfc] sm:$0xf] %vm771, %v706
    %vm836 = vcmask 31744
    %v837 = vsel %vm836, %v261, 0.0
    %v838 = vsel %vm836, %v264, 0.0
    %v839 = vadd.f32 %v837, %v838
    %v840 = vsel %vm836, %v269, 0.0
    %v841 = vadd.f32 %v839, %v840
    %v842 = vsel %vm836, %v272, 0.0
    %v843 = vadd.f32 %v841, %v842
    %v844 = vsel %vm836, %v277, 0.0
    %v845 = vadd.f32 %v843, %v844
    %v846 = vsel %vm836, %v280, 0.0
    %v847 = vadd.f32 %v845, %v846
    %v848 = vsel %vm836, %v285, 0.0
    %v849 = vadd.f32 %v847, %v848
    %v850 = vsel %vm836, %v288, 0.0
    %v851 = vadd.f32 %v849, %v850
    %v852 = vsel %vm836, %v293, 0.0
    %v853 = vadd.f32 %v851, %v852
    %v854 = vsel %vm836, %v296, 0.0
    %v855 = vadd.f32 %v853, %v854
    %v856 = vsel %vm836, %v301, 0.0
    %v857 = vadd.f32 %v855, %v856
    %v858 = vsel %vm836, %v304, 0.0
    %v859 = vadd.f32 %v857, %v858
    %v860 = vsel %vm836, %v309, 0.0
    %v861 = vadd.f32 %v859, %v860
    %v862 = vsel %vm836, %v312, 0.0
    %v863 = vadd.f32 %v861, %v862
    %v864 = vsel %vm836, %v317, 0.0
    %v865 = vadd.f32 %v863, %v864
    %v866 = vsel %vm836, %v320, 0.0
    %v867 = vadd.f32 %v865, %v866
    %v868 = vsel %vm836, %v325, 0.0
    %v869 = vadd.f32 %v867, %v868
    %v870 = vsel %vm836, %v328, 0.0
    %v871 = vadd.f32 %v869, %v870
    %v872 = vsel %vm836, %v333, 0.0
    %v873 = vadd.f32 %v871, %v872
    %v874 = vsel %vm836, %v336, 0.0
    %v875 = vadd.f32 %v873, %v874
    %v876 = vsel %vm836, %v341, 0.0
    %v877 = vadd.f32 %v875, %v876
    %v878 = vsel %vm836, %v344, 0.0
    %v879 = vadd.f32 %v877, %v878
    %v880 = vsel %vm836, %v349, 0.0
    %v881 = vadd.f32 %v879, %v880
    %v882 = vsel %vm836, %v352, 0.0
    %v883 = vadd.f32 %v881, %v882
    %v884 = vsel %vm836, %v357, 0.0
    %v885 = vadd.f32 %v883, %v884
    %v886 = vsel %vm836, %v360, 0.0
    %v887 = vadd.f32 %v885, %v886
    %v888 = vsel %vm836, %v365, 0.0
    %v889 = vadd.f32 %v887, %v888
    %v890 = vsel %vm836, %v368, 0.0
    %v891 = vadd.f32 %v889, %v890
    %v892 = vsel %vm836, %v373, 0.0
    %v893 = vadd.f32 %v891, %v892
    %v894 = vsel %vm836, %v376, 0.0
    %v895 = vadd.f32 %v893, %v894
    %v896 = vsel %vm836, %v381, 0.0
    %v897 = vadd.f32 %v895, %v896
    %v898 = vsel %vm836, %v384, 0.0
    %v899 = vadd.f32 %v897, %v898
    %v900 = vsel %vm836, %v389, 0.0
    %v901 = vadd.f32 %v899, %v900
    %v902 = vsel %vm836, %v392, 0.0
    %v903 = vadd.f32 %v901, %v902
    %v904 = vsel %vm836, %v397, 0.0
    %v905 = vadd.f32 %v903, %v904
    %v906 = vsel %vm836, %v400, 0.0
    %v907 = vadd.f32 %v905, %v906
    %v908 = vsel %vm836, %v405, 0.0
    %v909 = vadd.f32 %v907, %v908
    %v910 = vsel %vm836, %v408, 0.0
    %v911 = vadd.f32 %v909, %v910
    %v912 = vsel %vm836, %v413, 0.0
    %v913 = vadd.f32 %v911, %v912
    %v914 = vsel %vm836, %v416, 0.0
    %v915 = vadd.f32 %v913, %v914
    %v916 = vsel %vm836, %v421, 0.0
    %v917 = vadd.f32 %v915, %v916
    %v918 = vsel %vm836, %v424, 0.0
    %v919 = vadd.f32 %v917, %v918
    %v920 = vsel %vm836, %v429, 0.0
    %v921 = vadd.f32 %v919, %v920
    %v922 = vsel %vm836, %v432, 0.0
    %v923 = vadd.f32 %v921, %v922
    %v924 = vsel %vm836, %v437, 0.0
    %v925 = vadd.f32 %v923, %v924
    %v926 = vsel %vm836, %v440, 0.0
    %v927 = vadd.f32 %v925, %v926
    %v928 = vsel %vm836, %v445, 0.0
    %v929 = vadd.f32 %v927, %v928
    %v930 = vsel %vm836, %v448, 0.0
    %v931 = vadd.f32 %v929, %v930
    %v932 = vsel %vm836, %v453, 0.0
    %v933 = vadd.f32 %v931, %v932
    %v934 = vsel %vm836, %v456, 0.0
    %v935 = vadd.f32 %v933, %v934
    %v936 = vsel %vm836, %v461, 0.0
    %v937 = vadd.f32 %v935, %v936
    %v938 = vsel %vm836, %v464, 0.0
    %v939 = vadd.f32 %v937, %v938
    %v940 = vsel %vm836, %v469, 0.0
    %v941 = vadd.f32 %v939, %v940
    %v942 = vsel %vm836, %v472, 0.0
    %v943 = vadd.f32 %v941, %v942
    %v944 = vsel %vm836, %v477, 0.0
    %v945 = vadd.f32 %v943, %v944
    %v946 = vsel %vm836, %v480, 0.0
    %v947 = vadd.f32 %v945, %v946
    %v948 = vsel %vm836, %v485, 0.0
    %v949 = vadd.f32 %v947, %v948
    %v950 = vsel %vm836, %v488, 0.0
    %v951 = vadd.f32 %v949, %v950
    %v952 = vsel %vm836, %v493, 0.0
    %v953 = vadd.f32 %v951, %v952
    %v954 = vsel %vm836, %v496, 0.0
    %v955 = vadd.f32 %v953, %v954
    %v956 = vsel %vm836, %v501, 0.0
    %v957 = vadd.f32 %v955, %v956
    %v958 = vsel %vm836, %v504, 0.0
    %v959 = vadd.f32 %v957, %v958
    %v960 = vsel %vm836, %v509, 0.0
    %v961 = vadd.f32 %v959, %v960
    %v962 = vsel %vm836, %v512, 0.0
    %v963 = vadd.f32 %v961, %v962
    %v964 = vrot.slane %v963, 4
    %v965 = vadd.f32 %v963, %v964
    %v966 = vrot.slane %v965, 2
    %v967 = vadd.f32 %v965, %v966
    %v968 = vrot.slane %v967, 1
    %v969 = vadd.f32 %v967, %v968
    %v970 = vrcp.pop 512.0
    %v971 = vmul.f32 %v969, %v970
    %v972 = vsub.f32 %v261, %v971
    %v973 = vsub.f32 %v264, %v971
    %v974 = vsub.f32 %v269, %v971
    %v975 = vsub.f32 %v272, %v971
    %v976 = vsub.f32 %v277, %v971
    %v977 = vsub.f32 %v280, %v971
    %v978 = vsub.f32 %v285, %v971
    %v979 = vsub.f32 %v288, %v971
    %v980 = vsub.f32 %v293, %v971
    %v981 = vsub.f32 %v296, %v971
    %v982 = vsub.f32 %v301, %v971
    %v983 = vsub.f32 %v304, %v971
    %v984 = vsub.f32 %v309, %v971
    %v985 = vsub.f32 %v312, %v971
    %v986 = vsub.f32 %v317, %v971
    %v987 = vsub.f32 %v320, %v971
    %v988 = vsub.f32 %v325, %v971
    %v989 = vsub.f32 %v328, %v971
    %v990 = vsub.f32 %v333, %v971
    %v991 = vsub.f32 %v336, %v971
    %v992 = vsub.f32 %v341, %v971
    %v993 = vsub.f32 %v344, %v971
    %v994 = vsub.f32 %v349, %v971
    %v995 = vsub.f32 %v352, %v971
    %v996 = vsub.f32 %v357, %v971
    %v997 = vsub.f32 %v360, %v971
    %v998 = vsub.f32 %v365, %v971
    %v999 = vsub.f32 %v368, %v971
    %v1000 = vsub.f32 %v373, %v971
    %v1001 = vsub.f32 %v376, %v971
    %v1002 = vsub.f32 %v381, %v971
    %v1003 = vsub.f32 %v384, %v971
    %v1004 = vsub.f32 %v389, %v971
    %v1005 = vsub.f32 %v392, %v971
    %v1006 = vsub.f32 %v397, %v971
    %v1007 = vsub.f32 %v400, %v971
    %v1008 = vsub.f32 %v405, %v971
    %v1009 = vsub.f32 %v408, %v971
    %v1010 = vsub.f32 %v413, %v971
    %v1011 = vsub.f32 %v416, %v971
    %v1012 = vsub.f32 %v421, %v971
    %v1013 = vsub.f32 %v424, %v971
    %v1014 = vsub.f32 %v429, %v971
    %v1015 = vsub.f32 %v432, %v971
    %v1016 = vsub.f32 %v437, %v971
    %v1017 = vsub.f32 %v440, %v971
    %v1018 = vsub.f32 %v445, %v971
    %v1019 = vsub.f32 %v448, %v971
    %v1020 = vsub.f32 %v453, %v971
    %v1021 = vsub.f32 %v456, %v971
    %v1022 = vsub.f32 %v461, %v971
    %v1023 = vsub.f32 %v464, %v971
    %v1024 = vsub.f32 %v469, %v971
    %v1025 = vsub.f32 %v472, %v971
    %v1026 = vsub.f32 %v477, %v971
    %v1027 = vsub.f32 %v480, %v971
    %v1028 = vsub.f32 %v485, %v971
    %v1029 = vsub.f32 %v488, %v971
    %v1030 = vsub.f32 %v493, %v971
    %v1031 = vsub.f32 %v496, %v971
    %v1032 = vsub.f32 %v501, %v971
    %v1033 = vsub.f32 %v504, %v971
    %v1034 = vsub.f32 %v509, %v971
    %v1035 = vsub.f32 %v512, %v971
    %v1036 = vmul.f32 %v972, %v972
    %v1037 = vmul.f32 %v973, %v973
    %v1038 = vmul.f32 %v974, %v974
    %v1039 = vmul.f32 %v975, %v975
    %v1040 = vmul.f32 %v976, %v976
    %v1041 = vmul.f32 %v977, %v977
    %v1042 = vmul.f32 %v978, %v978
    %v1043 = vmul.f32 %v979, %v979
    %v1044 = vmul.f32 %v980, %v980
    %v1045 = vmul.f32 %v981, %v981
    %v1046 = vmul.f32 %v982, %v982
    %v1047 = vmul.f32 %v983, %v983
    %v1048 = vmul.f32 %v984, %v984
    %v1049 = vmul.f32 %v985, %v985
    %v1050 = vmul.f32 %v986, %v986
    %v1051 = vmul.f32 %v987, %v987
    %v1052 = vmul.f32 %v988, %v988
    %v1053 = vmul.f32 %v989, %v989
    %v1054 = vmul.f32 %v990, %v990
    %v1055 = vmul.f32 %v991, %v991
    %v1056 = vmul.f32 %v992, %v992
    %v1057 = vmul.f32 %v993, %v993
    %v1058 = vmul.f32 %v994, %v994
    %v1059 = vmul.f32 %v995, %v995
    %v1060 = vmul.f32 %v996, %v996
    %v1061 = vmul.f32 %v997, %v997
    %v1062 = vmul.f32 %v998, %v998
    %v1063 = vmul.f32 %v999, %v999
    %v1064 = vmul.f32 %v1000, %v1000
    %v1065 = vmul.f32 %v1001, %v1001
    %v1066 = vmul.f32 %v1002, %v1002
    %v1067 = vmul.f32 %v1003, %v1003
    %v1068 = vmul.f32 %v1004, %v1004
    %v1069 = vmul.f32 %v1005, %v1005
    %v1070 = vmul.f32 %v1006, %v1006
    %v1071 = vmul.f32 %v1007, %v1007
    %v1072 = vmul.f32 %v1008, %v1008
    %v1073 = vmul.f32 %v1009, %v1009
    %v1074 = vmul.f32 %v1010, %v1010
    %v1075 = vmul.f32 %v1011, %v1011
    %v1076 = vmul.f32 %v1012, %v1012
    %v1077 = vmul.f32 %v1013, %v1013
    %v1078 = vmul.f32 %v1014, %v1014
    %v1079 = vmul.f32 %v1015, %v1015
    %v1080 = vmul.f32 %v1016, %v1016
    %v1081 = vmul.f32 %v1017, %v1017
    %v1082 = vmul.f32 %v1018, %v1018
    %v1083 = vmul.f32 %v1019, %v1019
    %v1084 = vmul.f32 %v1020, %v1020
    %v1085 = vmul.f32 %v1021, %v1021
    %v1086 = vmul.f32 %v1022, %v1022
    %v1087 = vmul.f32 %v1023, %v1023
    %v1088 = vmul.f32 %v1024, %v1024
    %v1089 = vmul.f32 %v1025, %v1025
    %v1090 = vmul.f32 %v1026, %v1026
    %v1091 = vmul.f32 %v1027, %v1027
    %v1092 = vmul.f32 %v1028, %v1028
    %v1093 = vmul.f32 %v1029, %v1029
    %v1094 = vmul.f32 %v1030, %v1030
    %v1095 = vmul.f32 %v1031, %v1031
    %v1096 = vmul.f32 %v1032, %v1032
    %v1097 = vmul.f32 %v1033, %v1033
    %v1098 = vmul.f32 %v1034, %v1034
    %v1099 = vmul.f32 %v1035, %v1035
    %v1100 = vsel %vm836, %v1036, 0.0
    %v1101 = vsel %vm836, %v1037, 0.0
    %v1102 = vadd.f32 %v1100, %v1101
    %v1103 = vsel %vm836, %v1038, 0.0
    %v1104 = vadd.f32 %v1102, %v1103
    %v1105 = vsel %vm836, %v1039, 0.0
    %v1106 = vadd.f32 %v1104, %v1105
    %v1107 = vsel %vm836, %v1040, 0.0
    %v1108 = vadd.f32 %v1106, %v1107
    %v1109 = vsel %vm836, %v1041, 0.0
    %v1110 = vadd.f32 %v1108, %v1109
    %v1111 = vsel %vm836, %v1042, 0.0
    %v1112 = vadd.f32 %v1110, %v1111
    %v1113 = vsel %vm836, %v1043, 0.0
    %v1114 = vadd.f32 %v1112, %v1113
    %v1115 = vsel %vm836, %v1044, 0.0
    %v1116 = vadd.f32 %v1114, %v1115
    %v1117 = vsel %vm836, %v1045, 0.0
    %v1118 = vadd.f32 %v1116, %v1117
    %v1119 = vsel %vm836, %v1046, 0.0
    %v1120 = vadd.f32 %v1118, %v1119
    %v1121 = vsel %vm836, %v1047, 0.0
    %v1122 = vadd.f32 %v1120, %v1121
    %v1123 = vsel %vm836, %v1048, 0.0
    %v1124 = vadd.f32 %v1122, %v1123
    %v1125 = vsel %vm836, %v1049, 0.0
    %v1126 = vadd.f32 %v1124, %v1125
    %v1127 = vsel %vm836, %v1050, 0.0
    %v1128 = vadd.f32 %v1126, %v1127
    %v1129 = vsel %vm836, %v1051, 0.0
    %v1130 = vadd.f32 %v1128, %v1129
    %v1131 = vsel %vm836, %v1052, 0.0
    %v1132 = vadd.f32 %v1130, %v1131
    %v1133 = vsel %vm836, %v1053, 0.0
    %v1134 = vadd.f32 %v1132, %v1133
    %v1135 = vsel %vm836, %v1054, 0.0
    %v1136 = vadd.f32 %v1134, %v1135
    %v1137 = vsel %vm836, %v1055, 0.0
    %v1138 = vadd.f32 %v1136, %v1137
    %v1139 = vsel %vm836, %v1056, 0.0
    %v1140 = vadd.f32 %v1138, %v1139
    %v1141 = vsel %vm836, %v1057, 0.0
    %v1142 = vadd.f32 %v1140, %v1141
    %v1143 = vsel %vm836, %v1058, 0.0
    %v1144 = vadd.f32 %v1142, %v1143
    %v1145 = vsel %vm836, %v1059, 0.0
    %v1146 = vadd.f32 %v1144, %v1145
    %v1147 = vsel %vm836, %v1060, 0.0
    %v1148 = vadd.f32 %v1146, %v1147
    %v1149 = vsel %vm836, %v1061, 0.0
    %v1150 = vadd.f32 %v1148, %v1149
    %v1151 = vsel %vm836, %v1062, 0.0
    %v1152 = vadd.f32 %v1150, %v1151
    %v1153 = vsel %vm836, %v1063, 0.0
    %v1154 = vadd.f32 %v1152, %v1153
    %v1155 = vsel %vm836, %v1064, 0.0
    %v1156 = vadd.f32 %v1154, %v1155
    %v1157 = vsel %vm836, %v1065, 0.0
    %v1158 = vadd.f32 %v1156, %v1157
    %v1159 = vsel %vm836, %v1066, 0.0
    %v1160 = vadd.f32 %v1158, %v1159
    %v1161 = vsel %vm836, %v1067, 0.0
    %v1162 = vadd.f32 %v1160, %v1161
    %v1163 = vsel %vm836, %v1068, 0.0
    %v1164 = vadd.f32 %v1162, %v1163
    %v1165 = vsel %vm836, %v1069, 0.0
    %v1166 = vadd.f32 %v1164, %v1165
    %v1167 = vsel %vm836, %v1070, 0.0
    %v1168 = vadd.f32 %v1166, %v1167
    %v1169 = vsel %vm836, %v1071, 0.0
    %v1170 = vadd.f32 %v1168, %v1169
    %v1171 = vsel %vm836, %v1072, 0.0
    %v1172 = vadd.f32 %v1170, %v1171
    %v1173 = vsel %vm836, %v1073, 0.0
    %v1174 = vadd.f32 %v1172, %v1173
    %v1175 = vsel %vm836, %v1074, 0.0
    %v1176 = vadd.f32 %v1174, %v1175
    %v1177 = vsel %vm836, %v1075, 0.0
    %v1178 = vadd.f32 %v1176, %v1177
    %v1179 = vsel %vm836, %v1076, 0.0
    %v1180 = vadd.f32 %v1178, %v1179
    %v1181 = vsel %vm836, %v1077, 0.0
    %v1182 = vadd.f32 %v1180, %v1181
    %v1183 = vsel %vm836, %v1078, 0.0
    %v1184 = vadd.f32 %v1182, %v1183
    %v1185 = vsel %vm836, %v1079, 0.0
    %v1186 = vadd.f32 %v1184, %v1185
    %v1187 = vsel %vm836, %v1080, 0.0
    %v1188 = vadd.f32 %v1186, %v1187
    %v1189 = vsel %vm836, %v1081, 0.0
    %v1190 = vadd.f32 %v1188, %v1189
    %v1191 = vsel %vm836, %v1082, 0.0
    %v1192 = vadd.f32 %v1190, %v1191
    %v1193 = vsel %vm836, %v1083, 0.0
    %v1194 = vadd.f32 %v1192, %v1193
    %v1195 = vsel %vm836, %v1084, 0.0
    %v1196 = vadd.f32 %v1194, %v1195
    %v1197 = vsel %vm836, %v1085, 0.0
    %v1198 = vadd.f32 %v1196, %v1197
    %v1199 = vsel %vm836, %v1086, 0.0
    %v1200 = vadd.f32 %v1198, %v1199
    %v1201 = vsel %vm836, %v1087, 0.0
    %v1202 = vadd.f32 %v1200, %v1201
    %v1203 = vsel %vm836, %v1088, 0.0
    %v1204 = vadd.f32 %v1202, %v1203
    %v1205 = vsel %vm836, %v1089, 0.0
    %v1206 = vadd.f32 %v1204, %v1205
    %v1207 = vsel %vm836, %v1090, 0.0
    %v1208 = vadd.f32 %v1206, %v1207
    %v1209 = vsel %vm836, %v1091, 0.0
    %v1210 = vadd.f32 %v1208, %v1209
    %v1211 = vsel %vm836, %v1092, 0.0
    %v1212 = vadd.f32 %v1210, %v1211
    %v1213 = vsel %vm836, %v1093, 0.0
    %v1214 = vadd.f32 %v1212, %v1213
    %v1215 = vsel %vm836, %v1094, 0.0
    %v1216 = vadd.f32 %v1214, %v1215
    %v1217 = vsel %vm836, %v1095, 0.0
    %v1218 = vadd.f32 %v1216, %v1217
    %v1219 = vsel %vm836, %v1096, 0.0
    %v1220 = vadd.f32 %v1218, %v1219
    %v1221 = vsel %vm836, %v1097, 0.0
    %v1222 = vadd.f32 %v1220, %v1221
    %v1223 = vsel %vm836, %v1098, 0.0
    %v1224 = vadd.f32 %v1222, %v1223
    %v1225 = vsel %vm836, %v1099, 0.0
    %v1226 = vadd.f32 %v1224, %v1225
    %v1227 = vrot.slane %v1226, 4
    %v1228 = vadd.f32 %v1226, %v1227
    %v1229 = vrot.slane %v1228, 2
    %v1230 = vadd.f32 %v1228, %v1229
    %v1231 = vrot.slane %v1230, 1
    %v1232 = vadd.f32 %v1230, %v1231
    %vm1233 = vcmask 1040384
    %v1234 = vsel %vm1233, %v969, %v1232
    %vm1235 = vcmask 25600
    %1236 = vst.msk [vmem:[#allocation2] sm:$0x3] %vm1235, %v1234
    // Predicated region
    $region14: #{tpu_custom_call.1} parent=1 // pred_check
      _
    $region15: #{tpu_custom_call.1} parent=1 // pred_check_branch
      %1238 = sbr.rel (0) target = $region17
    $region16: #{tpu_custom_call.1} parent=1 // pred_region
      _
    $region17: #{tpu_custom_call.1} parent=1 // pred_fallthru
      _
    // Predicated region
    $region18: #{tpu_custom_call.1} parent=1 // pred_check
      _
    $region19: #{tpu_custom_call.1} parent=1 // pred_check_branch
      %1240 = sbr.rel (0) target = $region21
    $region20: #{tpu_custom_call.1} parent=1 // pred_region
      %s1242 = ssub.s32 32, 32
      %1243 = vsyncadd [#allocation3], %s1242
      %s1245 = sshll.u32 [#allocation2], 4
      %s1246 = int_to_ptr.vmem [resolvable:$true] %s1245
      %1248 = dma.vmem_to_hbm [thread:$0]  %s1246, 32, %s4, [#allocation3]
    $region21: #{tpu_custom_call.1} parent=1 // pred_fallthru
      _
    // Predicated region
    $region22: #{tpu_custom_call.1} parent=1 // pred_check
      _
    $region23: #{tpu_custom_call.1} parent=1 // pred_check_branch
      %1250 = sbr.rel (0) target = $region25
    $region24: #{tpu_custom_call.1} parent=1 // pred_region
      _
    $region25: #{tpu_custom_call.1} parent=1 // pred_fallthru
      _
    // Predicated region
    $region26: #{tpu_custom_call.1} parent=1 // pred_check
      _
    $region27: #{tpu_custom_call.1} parent=1 // pred_check_branch
      %1252 = sbr.rel (0) target = $region29
    $region28: #{tpu_custom_call.1} parent=1 // pred_region
      %1253 = dma.done [#allocation3], 32
    $region29: #{tpu_custom_call.1} parent=1 // pred_fallthru
      _
    %1254 = vsyncpa [#allocation3], 1

</llo_original>
